<compile_context>
chip_gen: v6e
topology: v6e:2x2x1
jax: 0.10.0
libtpu: 0.0.40
codegen_flags: <defaults>
</compile_context>

<pallas_src>
import functools
import math

import jax
import jax.numpy as jnp
from jax import lax
from jax.experimental import pallas as pl
from jax.experimental.pallas import tpu as pltpu

F32 = jnp.float32


# --------------------------------------------------------------------------
# Row-tiled fused linear (+ optional ReLU) kernel: y = x @ W + b
# --------------------------------------------------------------------------
def _linear_kernel(x_ref, w_ref, b_ref, o_ref, *, activation):
    y = jnp.dot(x_ref[...], w_ref[...], preferred_element_type=jnp.float32)
    y = y + b_ref[...]
    if activation == "relu":
        y = jnp.maximum(y, 0.0)
    o_ref[...] = y.astype(o_ref.dtype)


def linear(x, w, b, activation=None, block_rows=1024):
    m, k = x.shape
    n = w.shape[1]
    bm = m
    if m > block_rows:
        for cand in (1024, 512, 256, 128, 64, 32, 16, 8):
            if cand <= block_rows and m % cand == 0:
                bm = cand
                break
    return pl.pallas_call(
        functools.partial(_linear_kernel, activation=activation),
        grid=(m // bm,),
        out_shape=jax.ShapeDtypeStruct((m, n), F32),
        in_specs=[pl.BlockSpec((bm, k), lambda i: (i, 0)),
                  pl.BlockSpec((k, n), lambda i: (0, 0)),
                  pl.BlockSpec((1, n), lambda i: (0, 0))],
        out_specs=pl.BlockSpec((bm, n), lambda i: (i, 0)),
        compiler_params=pltpu.CompilerParams(
            dimension_semantics=("parallel",)),
    )(x, w, b)


# --------------------------------------------------------------------------
# One DAG-GNN layer: masked GAT attention over already-processed nodes +
# two GRUCells, run as a sequential recurrence over the utterance index.
# --------------------------------------------------------------------------
def _dag_layer_kernel(hl_ref, adj_ref, sm_ref, gic_ref, ghp_ref,
                      wq_ref, wk_ref, attb_ref, wr01_ref,
                      c_whh_ref, c_bhh_ref, p_wih_ref, p_bih_ref,
                      h1_ref, adjb_ref, sk_ref):
    # hl/gic/ghp: (N, bb, D/3D) node-major;  adj/sm/adjb: (N_row, bb, N_col);
    # sk_ref: (bb, N) incremental key-score cache.
    N, bb, D = hl_ref.shape

    # Rows >= current step must read as exact zeros so 0 * garbage never makes
    # NaN inside the masked weighted sums.
    h1_ref[...] = jnp.zeros(h1_ref.shape, h1_ref.dtype)
    sk_ref[...] = jnp.zeros(sk_ref.shape, sk_ref.dtype)

    def gru_out(gi, gh, h):
        # fused PyTorch GRUCell gates, (r, z, n) blocks along the last dim
        r = jax.nn.sigmoid(gi[:, :D] + gh[:, :D])
        z = jax.nn.sigmoid(gi[:, D:2 * D] + gh[:, D:2 * D])
        n = jnp.tanh(gi[:, 2 * D:] + r * gh[:, 2 * D:])
        return (1.0 - z) * n + z * h

    def step(i, carry):
        h_i = hl_ref[i]                     # (bb, D)   current node features
        adj_i = adj_ref[i]                  # (bb, N)   adj[:, i, :]
        sm_i = sm_ref[i]                    # (bb, N)   s_mask[:, i, :]
        gic_i = gic_ref[i]                  # (bb, 3D)  hoisted grus_c input gates
        ghp_i = ghp_ref[i]                  # (bb, 3D)  hoisted grus_p hidden gates
        h1_all = h1_ref[...]                # (N, bb, D) rows >= i are zero

        # ---- GAT scores: alpha_j = wq.Q + wk.K_j + b, masked to j < i -------
        sq = jnp.sum(h_i * wq_ref[...], axis=1, keepdims=True)      # (bb, 1)
        alpha = sq + sk_ref[...] + attb_ref[...]                    # (bb, N)
        col = lax.broadcasted_iota(jnp.int32, (bb, N), 1)
        valid = col < i
        alpha_m = alpha + (1.0 - adj_i) * (-1e30)                   # mask_logic
        alpha_v = jnp.where(valid, alpha_m, -3e38)
        mx = jnp.max(alpha_v, axis=1, keepdims=True)
        pexp = jnp.where(valid, jnp.exp(alpha_v - mx), 0.0)
        denom = jnp.sum(pexp, axis=1, keepdims=True)
        inv = pl.reciprocal(jnp.where(denom == 0.0, 1.0, denom), approx=True)
        attn = pexp * inv                   # (bb, N); all-zero at i == 0

        # ---- relation-aware aggregation (vectorized, no per-batch loop) -----
        #      M = [sum_j a_j s_j H1_j , sum_j a_j (1-s_j) H1_j] @ [Wr0; Wr1]
        attn_t = jnp.transpose(attn)                                # (N, bb)
        w0_t = attn_t * jnp.transpose(sm_i)
        w1_t = attn_t - w0_t
        m0 = jnp.sum(w0_t[:, :, None] * h1_all, axis=0)             # (bb, D)
        m1 = jnp.sum(w1_t[:, :, None] * h1_all, axis=0)             # (bb, D)
        M = jnp.dot(jnp.concatenate([m0, m1], axis=1), wr01_ref[...],
                    preferred_element_type=jnp.float32)             # (bb, D)

        # ---- two GRU cells; only the M-dependent gate halves run per step ---
        ghc = jnp.dot(M, c_whh_ref[...],
                      preferred_element_type=jnp.float32) + c_bhh_ref[...]
        gip = jnp.dot(M, p_wih_ref[...],
                      preferred_element_type=jnp.float32) + p_bih_ref[...]
        cp = gru_out(gic_i, ghc, M) + gru_out(gip, ghp_i, h_i)      # C + P

        h1_ref[i] = cp
        adjb_ref[i] = attn

        # incremental key-score cache: sk[:, i] = wk . H1_i
        skv = jnp.sum(cp * wk_ref[...], axis=1, keepdims=True)      # (bb, 1)
        sk_ref[...] = jnp.where(col == i, skv, sk_ref[...])
        return carry

    lax.fori_loop(0, N, step, 0)


def dag_layer(hl_t, adj_t, sm_t, gic_t, ghp_t, p):
    N, B, D = hl_t.shape
    # Megacore (v7x): split the independent batch axis across cores when the
    # resulting batch block still satisfies the (8, 128) sublane constraint.
    bb = B // 2 if (B % 16 == 0) else B
    grid = (B // bb,)
    bmap = lambda g: (0, g, 0)
    wmap = lambda g: (0, 0)

    in_specs = [
        pl.BlockSpec((N, bb, D), bmap),        # hl
        pl.BlockSpec((N, bb, N), bmap),        # adj rows
        pl.BlockSpec((N, bb, N), bmap),        # s_mask rows
        pl.BlockSpec((N, bb, 3 * D), bmap),    # hoisted grus_c input gates
        pl.BlockSpec((N, bb, 3 * D), bmap),    # hoisted grus_p hidden gates
        pl.BlockSpec((1, D), wmap),            # wq
        pl.BlockSpec((1, D), wmap),            # wk
        pl.BlockSpec((1, 1), wmap),            # attention bias
        pl.BlockSpec((2 * D, D), wmap),        # [Wr0; Wr1]
        pl.BlockSpec((D, 3 * D), wmap),        # grus_c W_hh (packed r|z|n)
        pl.BlockSpec((1, 3 * D), wmap),        # grus_c b_hh
        pl.BlockSpec((D, 3 * D), wmap),        # grus_p W_ih
        pl.BlockSpec((1, 3 * D), wmap),        # grus_p b_ih
    ]
    out_specs = (pl.BlockSpec((N, bb, D), bmap),
                 pl.BlockSpec((N, bb, N), bmap))
    out_shape = (jax.ShapeDtypeStruct((N, B, D), F32),
                 jax.ShapeDtypeStruct((N, B, N), F32))

    h1_t, adjB_t = pl.pallas_call(
        _dag_layer_kernel,
        grid=grid,
        out_shape=out_shape,
        in_specs=in_specs,
        out_specs=out_specs,
        scratch_shapes=[pltpu.VMEM((bb, N), F32)],
        compiler_params=pltpu.CompilerParams(
            dimension_semantics=("parallel",)),
    )(hl_t, adj_t, sm_t, gic_t, ghp_t,
      p["wq"], p["wk"], p["attb"], p["wr01"],
      p["c_whh"], p["c_bhh"], p["p_wih"], p["p_bih"])
    return h1_t, adjB_t


def run_dag_stack(h0_t, adj_rows_per_layer, sm_t, layer_params):
    N, B, D = h0_t.shape
    Hs = [h0_t]
    adjB_t = []
    for lp, adj_rows in zip(layer_params, adj_rows_per_layer):
        hprev = Hs[-1]
        h2d = hprev.reshape(N * B, D)
        # Step-invariant GRU halves: one big (N*B, D) @ (D, 3D) matmul each.
        gic = linear(h2d, lp["c_wih"], lp["c_bih"]).reshape(N, B, 3 * D)
        ghp = linear(h2d, lp["p_whh"], lp["p_bhh"]).reshape(N, B, 3 * D)
        h1, aB = dag_layer(hprev, adj_rows, sm_t, gic, ghp, lp)
        Hs.append(h1)
        adjB_t.append(aB)
    return Hs, adjB_t


# --------------------------------------------------------------------------
# Shared encoder/decoder branch: fc1 -> DAG-GNN stack -> MLP head.
# --------------------------------------------------------------------------
def _dag_branch(bp, feat2d, adj_rows_per_layer, sm_t, N, B):
    D = bp["fc1_w"].shape[1]
    L = len(bp["gnn"])
    h0 = linear(feat2d, bp["fc1_w"], bp["fc1_b"],
                activation="relu").reshape(N, B, D)
    Hs, adjB_t = run_dag_stack(h0, adj_rows_per_layer, sm_t, bp["gnn"])
    z = jnp.concatenate(Hs, axis=2).reshape(N * B, (L + 1) * D)
    # attentive_node_features with nodal_att_type=None is the identity;
    # nn.Dropout in eval mode is the identity.
    # TODO(synk): nodal_att_type != None branch not implemented (the reference
    # module's attentive_node_features in_dim is inconsistent with the tensor
    # actually passed, so only the None path is runnable).
    for w, b in bp["mlp_hidden"]:
        z = linear(z, w, b, activation="relu")
    out = linear(z, bp["mlp_out_w"], bp["mlp_out_b"])
    return out.reshape(N, B, -1), adjB_t


def cavae_dagnn_forward(params, features, adj, s_mask, s_mask_onehot, lengths):
    del s_mask_onehot, lengths      # unused by the reference forward path
    B, N, _ = features.shape
    L = len(params["enc"]["gnn"])

    # Node-major layouts, computed once (hoisted out of the per-layer loop).
    adj_t = jnp.transpose(adj, (1, 0, 2))          # (N_row, B, N_col)
    sm_t = jnp.transpose(s_mask, (1, 0, 2))        # (N_row, B, N_col)
    feat2d = jnp.transpose(features, (1, 0, 2)).reshape(N * B, -1)

    # ------------------------------- encoder -------------------------------
    fU_t, adjB_t = _dag_branch(params["enc"], feat2d, [adj_t] * L, sm_t, N, B)

    # ------------------------------- decoder -------------------------------
    # torch.linalg.solve(I, I - adjB) == I - adjB; build the decoder's
    # attention-mask rows directly in kernel layout (no transposes needed).
    # TODO(synk): GNN_decoder is assumed to share GAT_encoder's attention math
    # (returning only the attention sum) -- it is not defined in the reference.
    eye_rows = jnp.eye(N, dtype=F32)[:, None, :]                 # (N, 1, N)
    dec_masks = [eye_rows - a for a in adjB_t]
    code_dim = fU_t.shape[-1]
    logits_t, _ = _dag_branch(params["dec"], fU_t.reshape(N * B, code_dim),
                              dec_masks, sm_t, N, B)

    X = jnp.transpose(logits_t, (1, 0, 2))                       # (B, N, feat)
    adjB_2 = jnp.transpose(adjB_t[1], (1, 0, 2))                 # adjB_list[2]
    feature_map = jnp.eye(N, dtype=F32)[None] - adjB_2           # (B, N, N)
    return X, feature_map


# --------------------------------------------------------------------------
# Deterministic synthetic parameter initialization (packed layouts)
# --------------------------------------------------------------------------
def _uniform(key, shape, bound):
    return jax.random.uniform(key, shape, F32, -bound, bound)


def _init_gnn_layer(keys, hidden):
    bh = 1.0 / math.sqrt(hidden)
    b2h = 1.0 / math.sqrt(2 * hidden)
    return {
        "wq": _uniform(next(keys), (1, hidden), b2h),       # Linear(2D,1) halves
        "wk": _uniform(next(keys), (1, hidden), b2h),
        "attb": _uniform(next(keys), (1, 1), b2h),
        "wr01": _uniform(next(keys), (2 * hidden, hidden), bh),   # [Wr0; Wr1]
        "c_wih": _uniform(next(keys), (hidden, 3 * hidden), bh),  # (r|z|n) packed
        "c_whh": _uniform(next(keys), (hidden, 3 * hidden), bh),
        "c_bih": _uniform(next(keys), (1, 3 * hidden), bh),
        "c_bhh": _uniform(next(keys), (1, 3 * hidden), bh),
        "p_wih": _uniform(next(keys), (hidden, 3 * hidden), bh),
        "p_whh": _uniform(next(keys), (hidden, 3 * hidden), bh),
        "p_bih": _uniform(next(keys), (1, 3 * hidden), bh),
        "p_bhh": _uniform(next(keys), (1, 3 * hidden), bh),
    }


def _init_branch(keys, in_dim, hidden, gnn_layers, mlp_layers, out_dim):
    b_in = 1.0 / math.sqrt(in_dim)
    bh = 1.0 / math.sqrt(hidden)
    p = {
        "fc1_w": _uniform(next(keys), (in_dim, hidden), b_in),
        "fc1_b": _uniform(next(keys), (1, hidden), b_in),
        "gnn": [_init_gnn_layer(keys, hidden) for _ in range(gnn_layers)],
    }
    mlp_in = hidden * (gnn_layers + 1)
    bmi = 1.0 / math.sqrt(mlp_in)
    hid_layers = [(_uniform(next(keys), (mlp_in, hidden), bmi),
                   _uniform(next(keys), (1, hidden), bmi))]
    for _ in range(mlp_layers - 1):
        hid_layers.append((_uniform(next(keys), (hidden, hidden), bh),
                           _uniform(next(keys), (1, hidden), bh)))
    p["mlp_hidden"] = hid_layers
    p["mlp_out_w"] = _uniform(next(keys), (hidden, out_dim), bh)
    p["mlp_out_b"] = _uniform(next(keys), (1, out_dim), bh)
    return p


def init_params(key, emb_dim, hidden, gnn_layers, mlp_layers, code_dim, feat_dim):
    keys = iter(jax.random.split(key, 512))
    return {
        "enc": _init_branch(keys, emb_dim, hidden, gnn_layers, mlp_layers, code_dim),
        "dec": _init_branch(keys, code_dim, hidden, gnn_layers, mlp_layers, feat_dim),
    }


if __name__ == "__main__":
    # hidden chosen as a multiple of 128 so gate slices / concats are lane-tile
    # aligned (real configs should pad gnn_hidden_dim up to a 128 multiple).
    B, N, EMB, HID, L, MLP, CODE, FEAT = 2, 8, 16, 128, 2, 2, 8, 16

    key = jax.random.PRNGKey(0)
    k_feat, k_adj, k_sm, k_par = jax.random.split(key, 4)

    features = jax.random.normal(k_feat, (B, N, EMB), F32)
    adj = (jax.random.uniform(k_adj, (B, N, N)) > 0.5).astype(F32)
    s_mask = (jax.random.uniform(k_sm, (B, N, N)) > 0.5).astype(F32)
    s_mask_onehot = jnp.stack([1.0 - s_mask, s_mask], axis=-1)
    lengths = jnp.full((B,), N, jnp.int32)

    params = init_params(k_par, EMB, HID, L, MLP, CODE, FEAT)

    X, b_inv = cavae_dagnn_forward(
        params, features, adj, s_mask, s_mask_onehot, lengths)

    jax.block_until_ready(X)
    jax.block_until_ready(b_inv)

    assert X.shape == (B, N, FEAT)
    assert b_inv.shape == (B, N, N)
    assert bool(jnp.all(jnp.isfinite(X)))
    assert bool(jnp.all(jnp.isfinite(b_inv)))

    print("KERNEL_OK")
</pallas_src>

<mosaic_0001>
module attributes {stable_mosaic.version = 11 : i64} {
  func.func @_linear_kernel(%arg0: i32, %arg1: memref<16x16xf32, #tpu.memory_space<vmem>>, %arg2: memref<16x128xf32, #tpu.memory_space<vmem>>, %arg3: memref<1x128xf32, #tpu.memory_space<vmem>>, %arg4: memref<16x128xf32, #tpu.memory_space<vmem>>) attributes {dimension_semantics = [#tpu.dimension_semantics<parallel>], iteration_bounds = array<i64: 1>, scalar_prefetch = 0 : i64, scratch_operands = 0 : i64, tpu.core_type = #tpu.core_type<tc>, window_params = [{transform_indices = @transform_0, window_bounds = array<i64: 16, 16>}, {pipeline_mode = #tpu.pipeline_mode<synchronous>, transform_indices = @transform_1, window_bounds = array<i64: 16, 128>}, {pipeline_mode = #tpu.pipeline_mode<synchronous>, transform_indices = @transform_2, window_bounds = array<i64: 1, 128>}, {transform_indices = @transform_3, window_bounds = array<i64: 16, 128>}]} {
    %c0 = arith.constant 0 : index
    %c0_0 = arith.constant 0 : index
    %0 = vector.load %arg1[%c0, %c0_0] : memref<16x16xf32, #tpu.memory_space<vmem>>, vector<16x16xf32>
    %c0_1 = arith.constant 0 : index
    %c0_2 = arith.constant 0 : index
    %1 = vector.load %arg2[%c0_1, %c0_2] : memref<16x128xf32, #tpu.memory_space<vmem>>, vector<16x128xf32>
    %cst = arith.constant dense<0.000000e+00> : vector<16x128xf32>
    %2 = tpu.matmul %0, %1, %cst {dimension_numbers = #tpu.dot_dimension_numbers<[1], [0], [0], [1], [0, 0, 1, 1], [], []>} : vector<16x16xf32>, vector<16x128xf32>, vector<16x128xf32> -> vector<16x128xf32>
    %c0_3 = arith.constant 0 : index
    %c0_4 = arith.constant 0 : index
    %3 = vector.load %arg3[%c0_3, %c0_4] : memref<1x128xf32, #tpu.memory_space<vmem>>, vector<1x128xf32>
    %4 = vector.broadcast %3 : vector<1x128xf32> to vector<16x128xf32>
    %5 = arith.addf %2, %4 : vector<16x128xf32>
    %cst_5 = arith.constant 0.000000e+00 : f32
    %6 = vector.broadcast %cst_5 : f32 to vector<16x128xf32>
    %7 = arith.maximumf %5, %6 : vector<16x128xf32>
    %c0_6 = arith.constant 0 : index
    %c0_7 = arith.constant 0 : index
    %8 = vector.load %arg4[%c0_6, %c0_7] : memref<16x128xf32, #tpu.memory_space<vmem>>, vector<16x128xf32>
    tpu.vector_store %arg4[%c0_6, %c0_7], %7 {strides = array<i32>} : memref<16x128xf32, #tpu.memory_space<vmem>>, vector<16x128xf32>,
    return
  }
  func.func @transform_0(%arg0: i32) -> (i32, i32) {
    %c0_i32 = arith.constant 0 : i32
    %c0_i32_0 = arith.constant 0 : i32
    return %arg0, %c0_i32 : i32, i32
  }
  func.func @transform_1(%arg0: i32) -> (i32, i32) {
    %c0_i32 = arith.constant 0 : i32
    %c0_i32_0 = arith.constant 0 : i32
    %c0_i32_1 = arith.constant 0 : i32
    return %c0_i32, %c0_i32_0 : i32, i32
  }
  func.func @transform_2(%arg0: i32) -> (i32, i32) {
    %c0_i32 = arith.constant 0 : i32
    %c0_i32_0 = arith.constant 0 : i32
    %c0_i32_1 = arith.constant 0 : i32
    return %c0_i32, %c0_i32_0 : i32, i32
  }
  func.func @transform_3(%arg0: i32) -> (i32, i32) {
    %c0_i32 = arith.constant 0 : i32
    %c0_i32_0 = arith.constant 0 : i32
    return %arg0, %c0_i32 : i32, i32
  }
}

</mosaic_0001>

<llo_original>
// kernel: tpu_custom_call.1
$region0: #{tpu_custom_call.1}
  #allocation0 [shape = 'u32[]', space=smem, size = 0x4, offset = 0x4, fixed_abs, tag = 'smem constant byte address 0x4 - core index']
  #allocation1 [shape = 'u32[144,128]{1,0:T(1,128)}', space=vmem, size = 0x12000, scoped, tag = 'internal scratch']
  %s0 = inlined_call_operand.hbm [shape: f32[16,16], index: 0, kind: input, shape index: {}]
  %s1 = inlined_call_operand.hbm [shape: f32[16,128], index: 1, kind: input, shape index: {}]
  %s2 = inlined_call_operand.vmem [shape: f32[1,128], index: 2, kind: input, shape index: {}]
  %s3 = inlined_call_operand.hbm [shape: f32[16,128], index: 3, kind: output, shape index: {}]
  %s4 = sld [smem:[#allocation0]]
  $region30: #{tpu_custom_call.1} parent=0
    _
  %s6 = ssub.s32 1, %s4
  %s7 = scalar_select 0, %s6, %s4
  $region1: #{tpu_custom_call.1} parent=0
    #allocation2 [shape = 'u8[8192]{0}', space=vmem, size = 0x2000, scoped, tag = 'input window, operand 0, single buffered']
    #allocation3 [shape = 's32[1]{0}', space=sflag, size = 0x4, scoped, tag = 'scoped memory for tpu_custom_call.1']
    #allocation4 [shape = 's32[1]{0}', space=sflag, size = 0x4, scoped, tag = 'scoped memory for tpu_custom_call.1']
    #allocation5 [shape = 'u8[8192]{0}', space=vmem, size = 0x2000, scoped, tag = 'input window, operand 1, single buffered']
    #allocation6 [shape = 's32[1]{0}', space=sflag, size = 0x4, scoped, tag = 'scoped memory for tpu_custom_call.1']
    #allocation7 [shape = 'u8[8192]{0}', space=vmem, size = 0x2000, scoped, tag = 'output window, operand 0, single buffered']
    %8 = vsyncpa [#allocation3], 0
    %9 = vsyncpa [#allocation6], 0
    %10 = vsyncpa [#allocation4], 0
    // Predicated region
    $region2: #{tpu_custom_call.1} parent=1 // pred_check
      _
    $region3: #{tpu_custom_call.1} parent=1 // pred_check_branch
      %12 = sbr.rel (0) target = $region5
    $region4: #{tpu_custom_call.1} parent=1 // pred_region
      %s14 = ssub.s32 256, 256
      %15 = vsyncadd [#allocation3], %s14
      %s16 = sshll.u32 [#allocation2], 4
      %s17 = int_to_ptr.vmem [resolvable:$true] %s16
      %22 = dma.hbm_to_vmem [thread:$0]  %s0, 256, %s17, [#allocation3], 128, 128, 8
    $region5: #{tpu_custom_call.1} parent=1 // pred_fallthru
      _
    // Predicated region
    $region6: #{tpu_custom_call.1} parent=1 // pred_check
      _
    $region7: #{tpu_custom_call.1} parent=1 // pred_check_branch
      %24 = sbr.rel (0) target = $region9
    $region8: #{tpu_custom_call.1} parent=1 // pred_region
      %s26 = ssub.s32 256, 256
      %27 = vsyncadd [#allocation6], %s26
      %s28 = sshll.u32 [#allocation5], 4
      %s29 = int_to_ptr.vmem [resolvable:$true] %s28
      %34 = dma.hbm_to_vmem [thread:$0]  %s1, 256, %s29, [#allocation6], 128, 128, 8
    $region9: #{tpu_custom_call.1} parent=1 // pred_fallthru
      _
    // Predicated region
    $region10: #{tpu_custom_call.1} parent=1 // pred_check
      _
    $region11: #{tpu_custom_call.1} parent=1 // pred_check_branch
      %36 = sbr.rel (0) target = $region13
    $region12: #{tpu_custom_call.1} parent=1 // pred_region
      _
    $region13: #{tpu_custom_call.1} parent=1 // pred_fallthru
      _
    // Predicated region
    $region14: #{tpu_custom_call.1} parent=1 // pred_check
      _
    $region15: #{tpu_custom_call.1} parent=1 // pred_check_branch
      %38 = sbr.rel (0) target = $region17
    $region16: #{tpu_custom_call.1} parent=1 // pred_region
      %39 = dma.done [#allocation3], 256
    $region17: #{tpu_custom_call.1} parent=1 // pred_fallthru
      _
    // Predicated region
    $region18: #{tpu_custom_call.1} parent=1 // pred_check
      _
    $region19: #{tpu_custom_call.1} parent=1 // pred_check_branch
      %41 = sbr.rel (0) target = $region21
    $region20: #{tpu_custom_call.1} parent=1 // pred_region
      %42 = dma.done [#allocation6], 256
    $region21: #{tpu_custom_call.1} parent=1 // pred_fallthru
      _
    %v43 = vld [vmem:[#allocation2] sm:$0xff]
    %v44 = vld [vmem:[#allocation2 + $0x8] sm:$0xff]
    %v45 = vld [vmem:[#allocation5] sm:$0xff]
    %v46 = vld [vmem:[#allocation5 + $0x8] sm:$0xff]
    %v47 = vld [vmem:[%s2] sm:$0x1]
    %v49 = vlaneseq
    %v50 = vshrl.u32 %v49, 7
    %v51 = vsub.s32 0, %v50
    %v52 = vrot.slane %v47, %v51
    %vm54 = vcmask 130048
    %v56 = vsel %vm54, %v43, 0
    %v59 = vsel %vm54, %v44, 0
    %61 = vmatprep.subr.mxu0 0.0
    %62 = vmatpush1.msra.mxu0 0.0
    %63 = vmatprep.subr.mxu0 0.0
    %64 = vmatpush1.msra.mxu0 0.0
    %65 = vmatprep.subr.mxu0 0.0
    %66 = vmatpush1.msra.mxu0 0.0
    %67 = vmatprep.subr.mxu0 0.0
    %68 = vmatpush1.msra.mxu0 0.0
    %69 = vmatprep.subr.mxu0 0.0
    %70 = vmatpush1.msra.mxu0 0.0
    %71 = vmatprep.subr.mxu0 0.0
    %72 = vmatpush1.msra.mxu0 0.0
    %73 = vmatprep.subr.mxu0 0.0
    %74 = vmatpush1.msra.mxu0 0.0
    %75 = vmatprep.subr.mxu0 0.0
    %76 = vmatpush1.msra.mxu0 0.0
    %77 = vmatprep.subr.mxu0 0.0
    %78 = vmatpush1.msra.mxu0 0.0
    %79 = vmatprep.subr.mxu0 0.0
    %80 = vmatpush1.msra.mxu0 0.0
    %81 = vmatprep.subr.mxu0 0.0
    %82 = vmatpush1.msra.mxu0 0.0
    %83 = vmatprep.subr.mxu0 0.0
    %84 = vmatpush1.msra.mxu0 0.0
    %85 = vmatprep.subr.mxu0 0.0
    %86 = vmatpush1.msra.mxu0 0.0
    %87 = vmatprep.subr.mxu0 0.0
    %88 = vmatpush1.msra.mxu0 0.0
    %89 = vmatprep.subr.mxu0 0.0
    %90 = vmatpush1.msra.mxu0 %v46
    %91 = vmatprep.subr.mxu0 0.0
    %92 = vmatpush1.msra.mxu0 %v45
    %93 = vmatprep.subr.mxu0 0.0
    %94 = vmatpush2.msra.mxu0 0.0
    %95 = vmatprep.subr.mxu0 0.0
    %96 = vmatpush2.msra.mxu0 0.0
    %97 = vmatprep.subr.mxu0 0.0
    %98 = vmatpush2.msra.mxu0 0.0
    %99 = vmatprep.subr.mxu0 0.0
    %100 = vmatpush2.msra.mxu0 0.0
    %101 = vmatprep.subr.mxu0 0.0
    %102 = vmatpush2.msra.mxu0 0.0
    %103 = vmatprep.subr.mxu0 0.0
    %104 = vmatpush2.msra.mxu0 0.0
    %105 = vmatprep.subr.mxu0 0.0
    %106 = vmatpush2.msra.mxu0 0.0
    %107 = vmatprep.subr.mxu0 0.0
    %108 = vmatpush2.msra.mxu0 0.0
    %109 = vmatprep.subr.mxu0 0.0
    %110 = vmatpush2.msra.mxu0 0.0
    %111 = vmatprep.subr.mxu0 0.0
    %112 = vmatpush2.msra.mxu0 0.0
    %113 = vmatprep.subr.mxu0 0.0
    %114 = vmatpush2.msra.mxu0 0.0
    %115 = vmatprep.subr.mxu0 0.0
    %116 = vmatpush2.msra.mxu0 0.0
    %117 = vmatprep.subr.mxu0 0.0
    %118 = vmatpush2.msra.mxu0 0.0
    %119 = vmatprep.subr.mxu0 0.0
    %120 = vmatpush2.msra.mxu0 0.0
    %121 = vmatprep.subr.mxu0 0.0
    %122 = vmatpush2.msra.mxu0 0.0
    %123 = vmatprep.subr.mxu0 0.0
    %124 = vmatpush2.msra.mxu0 0.0
    %125 = vmatprep.mubr.f32.mxu0 0.0
    %126 = vmatmul.mubr.f32.gmra.mxu0 %v56
    %v127 = vpop.f32.mrf.mxu0
    %v128 = vadd.f32 %v52, %v127
    %v129 = vpop.f32.mrf.mxu0
    %130 = vmatprep.mubr.f32.mxu0 0.0
    %131 = vmatmul.mubr.f32.gmra.mxu0 %v59
    %v132 = vpop.f32.mrf.mxu0
    %v133 = vadd.f32 %v52, %v132
    %v134 = vpop.f32.mrf.mxu0
    %135 = vdwg.mxu0
    %v136 = vmax.f32 %v128, 0.0
    %v137 = vmax.f32 %v133, 0.0
    %138 = vst [vmem:[#allocation7] sm:$0xff] %v136
    %139 = vst [vmem:[#allocation7 + $0x8] sm:$0xff] %v137
    // Predicated region
    $region22: #{tpu_custom_call.1} parent=1 // pred_check
      _
    $region23: #{tpu_custom_call.1} parent=1 // pred_check_branch
      %141 = sbr.rel (0) target = $region25
    $region24: #{tpu_custom_call.1} parent=1 // pred_region
      %s143 = ssub.s32 256, 256
      %144 = vsyncadd [#allocation4], %s143
      %s145 = sshll.u32 [#allocation7], 4
      %s146 = int_to_ptr.vmem [resolvable:$true] %s145
      %151 = dma.vmem_to_hbm [thread:$0]  %s146, 256, %s3, [#allocation4], 128, 128, 8
    $region25: #{tpu_custom_call.1} parent=1 // pred_fallthru
      _
    // Predicated region
    $region26: #{tpu_custom_call.1} parent=1 // pred_check
      _
    $region27: #{tpu_custom_call.1} parent=1 // pred_check_branch
      %153 = sbr.rel (0) target = $region29
    $region28: #{tpu_custom_call.1} parent=1 // pred_region
      %154 = dma.done [#allocation4], 256
    $region29: #{tpu_custom_call.1} parent=1 // pred_fallthru
      _
    %155 = vsyncpa [#allocation3], 1
    %156 = vsyncpa [#allocation6], 1
    %157 = vsyncpa [#allocation4], 1

</llo_original>
